<compile_context>
chip_gen: v6e
topology: v6e:2x2x1
jax: 0.10.0
libtpu: 0.0.40
codegen_flags: <defaults>
</compile_context>

<pallas_src>
import functools

import jax
import jax.numpy as jnp
from jax.experimental import pallas as pl
from jax.experimental.pallas import tpu as pltpu


def _mlp_softmax_kernel(n_layers, *refs):
    """Fused MLP + softmax on one batch tile.

    refs = (x_ref, w0_ref, b0_ref, w1_ref, b1_ref, ..., o_ref)
      x_ref:  (TM, in_dim) VMEM tile (pipelined over the batch grid axis)
      w/b:    whole arrays, VMEM-resident (single-buffered, memory_space=VMEM);
              biases are pre-cast to f32 in the wrapper.
      o_ref:  (TM, out_dim) output tile (unpadded; block last dim == full array dim)
    """
    x_ref = refs[0]
    o_ref = refs[-1]
    param_refs = refs[1:-1]

    h = x_ref[...]
    if h.dtype != jnp.float32:
        h = h.astype(jnp.float32)

    for i in range(n_layers):
        w = param_refs[2 * i][...]
        b = param_refs[2 * i + 1][...]          # already f32 (cast once in wrapper)
        # Feed the MXU in the weight storage dtype (f32 or bf16), accumulate in f32.
        lhs = h if h.dtype == w.dtype else h.astype(w.dtype)
        h = jnp.dot(lhs, w, preferred_element_type=jnp.float32)
        h = h + b
        if i < n_layers - 1:                    # ReLU on every layer except the last
            h = jnp.maximum(h, 0.0)

    # Numerically stable softmax over the last axis, in f32.
    m = jnp.max(h, axis=-1, keepdims=True)
    e = jnp.exp(h - m)
    s = jnp.sum(e, axis=-1, keepdims=True)
    r = pl.reciprocal(s, approx=True)   # EUP slot
    r = r * (2.0 - s * r)               # one Newton step -> ~f32-exact, keeps 1e-5 tol
    o_ref[...] = (e * r).astype(o_ref.dtype)


def _pick_batch_tile(batch):
    """Largest tile that still leaves >= 2 grid steps (keeps both v7x TCs busy).

    Per-step VMEM is tiny ((tm*in_dim + tm*out_dim)*4 B double-buffered), so large
    tiles fit comfortably within every generation's scoped VMEM budget.
    """
    for tm in (4096, 2048, 1024, 512, 256, 128):
        if batch >= 2 * tm:
            return tm
    return batch  # small batch: single full-batch block (block dim == full array dim)


def neural_net_forward(x, params, *, block_batch=None, out_dtype=jnp.float32):
    """params: list of (W, b) with W shaped (in, out) [PyTorch W.T], b shaped (1, out).

    Biases are cast to f32 once here; weights may be f32 (recommended on v5e) or
    bf16 (v6e/v7x). out_dtype=bf16 halves output HBM bytes on v6e/v7x.
    """
    params = [(w, b.astype(jnp.float32)) for (w, b) in params]
    n_layers = len(params)
    batch, in_dim = x.shape
    out_dim = params[-1][0].shape[1]

    flat_params = []
    for w, b in params:
        flat_params.extend([w, b])

    tm = block_batch if block_batch is not None else _pick_batch_tile(batch)
    tm = min(tm, batch)
    grid = (pl.cdiv(batch, tm),)   # partial last block OK: rows are independent,
                                   # OOB output writes are discarded by Pallas.

    # Activations: streamed/pipelined over the batch grid axis.
    x_spec = pl.BlockSpec((tm, in_dim), lambda i: (i, 0))
    # Weights/biases: whole arrays resident in VMEM, no pipelining / double-buffering.
    param_spec = pl.BlockSpec(memory_space=pltpu.MemorySpace.VMEM)
    # Unpadded output: block last dim == full array dim -> no wrapper-side slice,
    # no extra HBM pass over the output stream.
    out_spec = pl.BlockSpec((tm, out_dim), lambda i: (i, 0))

    kernel = functools.partial(_mlp_softmax_kernel, n_layers)

    out = pl.pallas_call(
        kernel,
        out_shape=jax.ShapeDtypeStruct((batch, out_dim), out_dtype),
        grid=grid,
        in_specs=[x_spec] + [param_spec] * len(flat_params),
        out_specs=out_spec,
        compiler_params=pltpu.CompilerParams(
            # Batch axis is embarrassingly parallel -> megacore sharding on v7x.
            dimension_semantics=("parallel",)
        ),
        # TODO(synk): if hidden_dims grow beyond VMEM-resident weights (threshold is
        # ~half on v7x: 64 MiB physical / 32 MiB scoped), split the K reduction over a
        # grid axis / emit_pipeline and set vmem_limit_bytes explicitly; if xprof shows
        # exposed input DMA at large tm, add pipeline_mode=pl.Buffered(3) on x_spec.
    )(x, *flat_params)

    return out


def init_params(key, input_dim, hidden_dims, output_dim):
    """Deterministic init mirroring the PyTorch module's layer shapes (f32)."""
    dims = [input_dim] + list(hidden_dims) + [output_dim]
    params = []
    for i in range(len(dims) - 1):
        key, kw, kb = jax.random.split(key, 3)
        fan_in, fan_out = dims[i], dims[i + 1]
        bound = 1.0 / jnp.sqrt(fan_in)
        # Stored as (in, out): equivalent to PyTorch's (out, in) weight transposed.
        w = jax.random.uniform(kw, (fan_in, fan_out), jnp.float32, -bound, bound)
        b = jax.random.uniform(kb, (1, fan_out), jnp.float32, -bound, bound)
        params.append((w, b))
    return params


def reference_forward(x, params):
    """Pure-JAX reference with the same dtype discipline as the kernel."""
    h = x.astype(jnp.float32)
    for i, (w, b) in enumerate(params):
        lhs = h if h.dtype == w.dtype else h.astype(w.dtype)
        h = jnp.dot(lhs, w, preferred_element_type=jnp.float32) + b.astype(jnp.float32)
        if i < len(params) - 1:
            h = jnp.maximum(h, 0.0)
    return jax.nn.softmax(h, axis=-1)


if __name__ == "__main__":
    input_dim = 32
    hidden_dims = [64, 32]
    output_dim = 16

    key = jax.random.PRNGKey(0)
    key, kx = jax.random.split(key)
    params = init_params(key, input_dim, hidden_dims, output_dim)

    # --- small-batch check (single grid step, full-batch block) ---
    batch = 8
    x = jax.random.normal(kx, (batch, input_dim), jnp.float32)
    out = jax.block_until_ready(neural_net_forward(x, params))
    ref = reference_forward(x, params)
    assert out.shape == (batch, output_dim)
    assert jnp.allclose(out, ref, atol=1e-5, rtol=1e-5), "mismatch vs reference (f32, batch=8)"
    assert jnp.allclose(jnp.sum(out, axis=-1), 1.0, atol=1e-5), "softmax rows must sum to 1"

    # --- batch-tiled check (grid > 1, parallel batch axis / megacore path) ---
    batch_big = 512
    key, kx2 = jax.random.split(key)
    xb = jax.random.normal(kx2, (batch_big, input_dim), jnp.float32)
    out_b = jax.block_until_ready(neural_net_forward(xb, params))
    ref_b = reference_forward(xb, params)
    assert out_b.shape == (batch_big, output_dim)
    assert jnp.allclose(out_b, ref_b, atol=1e-5, rtol=1e-5), "mismatch vs reference (f32, tiled)"
    assert jnp.allclose(jnp.sum(out_b, axis=-1), 1.0, atol=1e-5), "softmax rows must sum to 1"

    # --- non-divisible batch (pl.cdiv grid, masked partial last block) ---
    batch_odd = 300
    key, kx3 = jax.random.split(key)
    xo = jax.random.normal(kx3, (batch_odd, input_dim), jnp.float32)
    out_o = jax.block_until_ready(neural_net_forward(xo, params))
    ref_o = reference_forward(xo, params)
    assert out_o.shape == (batch_odd, output_dim)
    assert jnp.allclose(out_o, ref_o, atol=1e-5, rtol=1e-5), "mismatch vs reference (remainder)"

    # --- bf16 output (v6e/v7x: halves output HBM writeback) ---
    out_bf16o = jax.block_until_ready(
        neural_net_forward(xb, params, out_dtype=jnp.bfloat16))
    assert out_bf16o.dtype == jnp.bfloat16
    assert jnp.allclose(out_bf16o.astype(jnp.float32), ref_b, atol=5e-3, rtol=5e-3), \
        "mismatch vs reference (bf16 output)"

    # --- bf16 weight storage (v6e/v7x MXU-native; keep f32 weights on v5e) ---
    params_bf16 = [(w.astype(jnp.bfloat16), b) for w, b in params]
    out_bf = jax.block_until_ready(neural_net_forward(xb, params_bf16))
    ref_bf = reference_forward(xb, params_bf16)
    assert out_bf.shape == (batch_big, output_dim)
    assert jnp.allclose(out_bf, ref_bf, atol=2e-3, rtol=2e-3), "mismatch vs reference (bf16 weights)"

    print("KERNEL_OK")
</pallas_src>

<mosaic_0001>
module attributes {stable_mosaic.version = 11 : i64} {
  func.func @_mlp_softmax_kernel(%arg0: i32, %arg1: memref<8x32xf32, #tpu.memory_space<vmem>>, %arg2: memref<32x64xf32, #tpu.memory_space<vmem>>, %arg3: memref<1x64xf32, #tpu.memory_space<vmem>>, %arg4: memref<64x32xf32, #tpu.memory_space<vmem>>, %arg5: memref<1x32xf32, #tpu.memory_space<vmem>>, %arg6: memref<32x16xf32, #tpu.memory_space<vmem>>, %arg7: memref<1x16xf32, #tpu.memory_space<vmem>>, %arg8: memref<8x16xf32, #tpu.memory_space<vmem>>) attributes {dimension_semantics = [#tpu.dimension_semantics<parallel>], iteration_bounds = array<i64: 1>, scalar_prefetch = 0 : i64, scratch_operands = 0 : i64, tpu.core_type = #tpu.core_type<tc>, window_params = [{transform_indices = @transform_0, window_bounds = array<i64: 8, 32>}, {pipeline_mode = #tpu.pipeline_mode<synchronous>, transform_indices = @transform_1, window_bounds = array<i64: 32, 64>}, {pipeline_mode = #tpu.pipeline_mode<synchronous>, transform_indices = @transform_2, window_bounds = array<i64: 1, 64>}, {pipeline_mode = #tpu.pipeline_mode<synchronous>, transform_indices = @transform_3, window_bounds = array<i64: 64, 32>}, {pipeline_mode = #tpu.pipeline_mode<synchronous>, transform_indices = @transform_4, window_bounds = array<i64: 1, 32>}, {pipeline_mode = #tpu.pipeline_mode<synchronous>, transform_indices = @transform_5, window_bounds = array<i64: 32, 16>}, {pipeline_mode = #tpu.pipeline_mode<synchronous>, transform_indices = @transform_6, window_bounds = array<i64: 1, 16>}, {transform_indices = @transform_7, window_bounds = array<i64: 8, 16>}]} {
    %c0 = arith.constant 0 : index
    %c0_0 = arith.constant 0 : index
    %0 = vector.load %arg1[%c0, %c0_0] : memref<8x32xf32, #tpu.memory_space<vmem>>, vector<8x32xf32>
    %c0_1 = arith.constant 0 : index
    %c0_2 = arith.constant 0 : index
    %1 = vector.load %arg2[%c0_1, %c0_2] : memref<32x64xf32, #tpu.memory_space<vmem>>, vector<32x64xf32>
    %c0_3 = arith.constant 0 : index
    %c0_4 = arith.constant 0 : index
    %2 = vector.load %arg3[%c0_3, %c0_4] : memref<1x64xf32, #tpu.memory_space<vmem>>, vector<1x64xf32>
    %cst = arith.constant dense<0.000000e+00> : vector<8x64xf32>
    %3 = tpu.matmul %0, %1, %cst {dimension_numbers = #tpu.dot_dimension_numbers<[1], [0], [0], [1], [0, 0, 1, 1], [], []>} : vector<8x32xf32>, vector<32x64xf32>, vector<8x64xf32> -> vector<8x64xf32>
    %4 = vector.broadcast %2 : vector<1x64xf32> to vector<8x64xf32>
    %5 = arith.addf %3, %4 : vector<8x64xf32>
    %cst_5 = arith.constant 0.000000e+00 : f32
    %6 = vector.broadcast %cst_5 : f32 to vector<8x64xf32>
    %7 = arith.maximumf %5, %6 : vector<8x64xf32>
    %c0_6 = arith.constant 0 : index
    %c0_7 = arith.constant 0 : index
    %8 = vector.load %arg4[%c0_6, %c0_7] : memref<64x32xf32, #tpu.memory_space<vmem>>, vector<64x32xf32>
    %c0_8 = arith.constant 0 : index
    %c0_9 = arith.constant 0 : index
    %9 = vector.load %arg5[%c0_8, %c0_9] : memref<1x32xf32, #tpu.memory_space<vmem>>, vector<1x32xf32>
    %cst_10 = arith.constant dense<0.000000e+00> : vector<8x32xf32>
    %10 = tpu.matmul %7, %8, %cst_10 {dimension_numbers = #tpu.dot_dimension_numbers<[1], [0], [0], [1], [0, 0, 1, 1], [], []>} : vector<8x64xf32>, vector<64x32xf32>, vector<8x32xf32> -> vector<8x32xf32>
    %11 = vector.broadcast %9 : vector<1x32xf32> to vector<8x32xf32>
    %12 = arith.addf %10, %11 : vector<8x32xf32>
    %cst_11 = arith.constant 0.000000e+00 : f32
    %13 = vector.broadcast %cst_11 : f32 to vector<8x32xf32>
    %14 = arith.maximumf %12, %13 : vector<8x32xf32>
    %c0_12 = arith.constant 0 : index
    %c0_13 = arith.constant 0 : index
    %15 = vector.load %arg6[%c0_12, %c0_13] : memref<32x16xf32, #tpu.memory_space<vmem>>, vector<32x16xf32>
    %c0_14 = arith.constant 0 : index
    %c0_15 = arith.constant 0 : index
    %16 = vector.load %arg7[%c0_14, %c0_15] : memref<1x16xf32, #tpu.memory_space<vmem>>, vector<1x16xf32>
    %cst_16 = arith.constant dense<0.000000e+00> : vector<8x16xf32>
    %17 = tpu.matmul %14, %15, %cst_16 {dimension_numbers = #tpu.dot_dimension_numbers<[1], [0], [0], [1], [0, 0, 1, 1], [], []>} : vector<8x32xf32>, vector<32x16xf32>, vector<8x16xf32> -> vector<8x16xf32>
    %18 = vector.broadcast %16 : vector<1x16xf32> to vector<8x16xf32>
    %19 = arith.addf %17, %18 : vector<8x16xf32>
    %cst_17 = arith.constant dense<0xFF800000> : vector<8xf32>
    %20 = vector.multi_reduction <maximumf>, %19, %cst_17 [1] : vector<8x16xf32> to vector<8xf32>
    %21 = vector.shape_cast %20 : vector<8xf32> to vector<8x1xf32>
    %22 = vector.broadcast %21 : vector<8x1xf32> to vector<8x16xf32>
    %23 = arith.subf %19, %22 : vector<8x16xf32>
    %24 = math.exp %23 : vector<8x16xf32>
    %cst_18 = arith.constant dense<0.000000e+00> : vector<8xf32>
    %25 = vector.multi_reduction <add>, %24, %cst_18 [1] : vector<8x16xf32> to vector<8xf32>
    %26 = vector.shape_cast %25 : vector<8xf32> to vector<8x1xf32>
    %27 = tpu.reciprocal %26 {approx = true} : vector<8x1xf32> -> vector<8x1xf32>
    %28 = arith.mulf %26, %27 : vector<8x1xf32>
    %cst_19 = arith.constant 2.000000e+00 : f32
    %29 = vector.broadcast %cst_19 : f32 to vector<8x1xf32>
    %30 = arith.subf %29, %28 : vector<8x1xf32>
    %31 = arith.mulf %27, %30 : vector<8x1xf32>
    %32 = vector.broadcast %31 : vector<8x1xf32> to vector<8x16xf32>
    %33 = arith.mulf %24, %32 : vector<8x16xf32>
    %c0_20 = arith.constant 0 : index
    %c0_21 = arith.constant 0 : index
    %34 = vector.load %arg8[%c0_20, %c0_21] : memref<8x16xf32, #tpu.memory_space<vmem>>, vector<8x16xf32>
    tpu.vector_store %arg8[%c0_20, %c0_21], %33 {strides = array<i32>} : memref<8x16xf32, #tpu.memory_space<vmem>>, vector<8x16xf32>,
    return
  }
  func.func @transform_0(%arg0: i32) -> (i32, i32) {
    %c0_i32 = arith.constant 0 : i32
    %c0_i32_0 = arith.constant 0 : i32
    return %arg0, %c0_i32 : i32, i32
  }
  func.func @transform_1(%arg0: i32) -> (i32, i32) {
    %c0_i32 = arith.constant 0 : i32
    %c0_i32_0 = arith.constant 0 : i32
    %c0_i32_1 = arith.constant 0 : i32
    return %c0_i32, %c0_i32_0 : i32, i32
  }
  func.func @transform_2(%arg0: i32) -> (i32, i32) {
    %c0_i32 = arith.constant 0 : i32
    %c0_i32_0 = arith.constant 0 : i32
    %c0_i32_1 = arith.constant 0 : i32
    return %c0_i32, %c0_i32_0 : i32, i32
  }
  func.func @transform_3(%arg0: i32) -> (i32, i32) {
    %c0_i32 = arith.constant 0 : i32
    %c0_i32_0 = arith.constant 0 : i32
    %c0_i32_1 = arith.constant 0 : i32
    return %c0_i32, %c0_i32_0 : i32, i32
  }
  func.func @transform_4(%arg0: i32) -> (i32, i32) {
    %c0_i32 = arith.constant 0 : i32
    %c0_i32_0 = arith.constant 0 : i32
    %c0_i32_1 = arith.constant 0 : i32
    return %c0_i32, %c0_i32_0 : i32, i32
  }
  func.func @transform_5(%arg0: i32) -> (i32, i32) {
    %c0_i32 = arith.constant 0 : i32
    %c0_i32_0 = arith.constant 0 : i32
    %c0_i32_1 = arith.constant 0 : i32
    return %c0_i32, %c0_i32_0 : i32, i32
  }
  func.func @transform_6(%arg0: i32) -> (i32, i32) {
    %c0_i32 = arith.constant 0 : i32
    %c0_i32_0 = arith.constant 0 : i32
    %c0_i32_1 = arith.constant 0 : i32
    return %c0_i32, %c0_i32_0 : i32, i32
  }
  func.func @transform_7(%arg0: i32) -> (i32, i32) {
    %c0_i32 = arith.constant 0 : i32
    %c0_i32_0 = arith.constant 0 : i32
    return %arg0, %c0_i32 : i32, i32
  }
}

</mosaic_0001>

<llo_original>
// kernel: tpu_custom_call.1
$region0: #{tpu_custom_call.1}
  #allocation0 [shape = 'u32[]', space=smem, size = 0x4, offset = 0x4, fixed_abs, tag = 'smem constant byte address 0x4 - core index']
  #allocation1 [shape = 'u32[144,128]{1,0:T(1,128)}', space=vmem, size = 0x12000, scoped, tag = 'internal scratch']
  %s0 = inlined_call_operand.vmem [shape: f32[8,32], index: 0, kind: input, shape index: {}]
  %s1 = inlined_call_operand.vmem [shape: f32[32,64], index: 1, kind: input, shape index: {}]
  %s2 = inlined_call_operand.vmem [shape: f32[1,64], index: 2, kind: input, shape index: {}]
  %s3 = inlined_call_operand.vmem [shape: f32[64,32], index: 3, kind: input, shape index: {}]
  %s4 = inlined_call_operand.vmem [shape: f32[1,32], index: 4, kind: input, shape index: {}]
  %s5 = inlined_call_operand.vmem [shape: f32[32,16], index: 5, kind: input, shape index: {}]
  %s6 = inlined_call_operand.vmem [shape: f32[1,16], index: 6, kind: input, shape index: {}]
  %s7 = inlined_call_operand.hbm [shape: f32[8,16], index: 7, kind: output, shape index: {}]
  %s8 = sld [smem:[#allocation0]]
  $region38: #{tpu_custom_call.1} parent=0
    _
  %s10 = ssub.s32 1, %s8
  %s11 = scalar_select 0, %s10, %s8
  $region1: #{tpu_custom_call.1} parent=0
    #allocation2 [shape = 'u8[4096]{0}', space=vmem, size = 0x1000, scoped, tag = 'output window, operand 0, single buffered']
    #allocation3 [shape = 's32[1]{0}', space=sflag, size = 0x4, scoped, tag = 'scoped memory for tpu_custom_call.1']
    %12 = vsyncpa [#allocation3], 0
    // Predicated region
    $region2: #{tpu_custom_call.1} parent=1 // pred_check
      _
    $region3: #{tpu_custom_call.1} parent=1 // pred_check_branch
      %14 = sbr.rel (0) target = $region5
    $region4: #{tpu_custom_call.1} parent=1 // pred_region
      _
    $region5: #{tpu_custom_call.1} parent=1 // pred_fallthru
      _
    // Predicated region
    $region6: #{tpu_custom_call.1} parent=1 // pred_check
      _
    $region7: #{tpu_custom_call.1} parent=1 // pred_check_branch
      %16 = sbr.rel (0) target = $region9
    $region8: #{tpu_custom_call.1} parent=1 // pred_region
      _
    $region9: #{tpu_custom_call.1} parent=1 // pred_fallthru
      _
    // Predicated region
    $region10: #{tpu_custom_call.1} parent=1 // pred_check
      _
    $region11: #{tpu_custom_call.1} parent=1 // pred_check_branch
      %18 = sbr.rel (0) target = $region13
    $region12: #{tpu_custom_call.1} parent=1 // pred_region
      _
    $region13: #{tpu_custom_call.1} parent=1 // pred_fallthru
      _
    // Predicated region
    $region14: #{tpu_custom_call.1} parent=1 // pred_check
      _
    $region15: #{tpu_custom_call.1} parent=1 // pred_check_branch
      %20 = sbr.rel (0) target = $region17
    $region16: #{tpu_custom_call.1} parent=1 // pred_region
      _
    $region17: #{tpu_custom_call.1} parent=1 // pred_fallthru
      _
    // Predicated region
    $region18: #{tpu_custom_call.1} parent=1 // pred_check
      _
    $region19: #{tpu_custom_call.1} parent=1 // pred_check_branch
      %22 = sbr.rel (0) target = $region21
    $region20: #{tpu_custom_call.1} parent=1 // pred_region
      _
    $region21: #{tpu_custom_call.1} parent=1 // pred_fallthru
      _
    // Predicated region
    $region22: #{tpu_custom_call.1} parent=1 // pred_check
      _
    $region23: #{tpu_custom_call.1} parent=1 // pred_check_branch
      %24 = sbr.rel (0) target = $region25
    $region24: #{tpu_custom_call.1} parent=1 // pred_region
      _
    $region25: #{tpu_custom_call.1} parent=1 // pred_fallthru
      _
    // Predicated region
    $region26: #{tpu_custom_call.1} parent=1 // pred_check
      _
    $region27: #{tpu_custom_call.1} parent=1 // pred_check_branch
      %26 = sbr.rel (0) target = $region29
    $region28: #{tpu_custom_call.1} parent=1 // pred_region
      _
    $region29: #{tpu_custom_call.1} parent=1 // pred_fallthru
      _
    %v27 = vld [vmem:[%s0] sm:$0xff]
    %v28 = vld [vmem:[%s1] sm:$0xff]
    %v29 = vld [vmem:[%s1 + $0x8] sm:$0xff]
    %v30 = vld [vmem:[%s1 + $0x10] sm:$0xff]
    %v31 = vld [vmem:[%s1 + $0x18] sm:$0xff]
    %v32 = vld [vmem:[%s2] sm:$0x1]
    %v34 = vlaneseq
    %v35 = vshrl.u32 %v34, 7
    %v36 = vsub.s32 0, %v35
    %v37 = vrot.slane %v32, %v36
    %vm39 = vcmask 261120
    %v41 = vsel %vm39, %v27, 0
    %43 = vmatprep.subr.mxu0 0.0
    %44 = vmatpush1.msra.mxu0 0.0
    %45 = vmatprep.subr.mxu0 0.0
    %46 = vmatpush1.msra.mxu0 0.0
    %47 = vmatprep.subr.mxu0 0.0
    %48 = vmatpush1.msra.mxu0 0.0
    %49 = vmatprep.subr.mxu0 0.0
    %50 = vmatpush1.msra.mxu0 0.0
    %51 = vmatprep.subr.mxu0 0.0
    %52 = vmatpush1.msra.mxu0 0.0
    %53 = vmatprep.subr.mxu0 0.0
    %54 = vmatpush1.msra.mxu0 0.0
    %55 = vmatprep.subr.mxu0 0.0
    %56 = vmatpush1.msra.mxu0 0.0
    %57 = vmatprep.subr.mxu0 0.0
    %58 = vmatpush1.msra.mxu0 0.0
    %59 = vmatprep.subr.mxu0 0.0
    %60 = vmatpush1.msra.mxu0 0.0
    %61 = vmatprep.subr.mxu0 0.0
    %62 = vmatpush1.msra.mxu0 0.0
    %63 = vmatprep.subr.mxu0 0.0
    %64 = vmatpush1.msra.mxu0 0.0
    %65 = vmatprep.subr.mxu0 0.0
    %66 = vmatpush1.msra.mxu0 0.0
    %67 = vmatprep.subr.mxu0 0.0
    %68 = vmatpush1.msra.mxu0 %v31
    %69 = vmatprep.subr.mxu0 0.0
    %70 = vmatpush1.msra.mxu0 %v30
    %71 = vmatprep.subr.mxu0 0.0
    %72 = vmatpush1.msra.mxu0 %v29
    %73 = vmatprep.subr.mxu0 0.0
    %74 = vmatpush1.msra.mxu0 %v28
    %75 = vmatprep.subr.mxu0 0.0
    %76 = vmatpush2.msra.mxu0 0.0
    %77 = vmatprep.subr.mxu0 0.0
    %78 = vmatpush2.msra.mxu0 0.0
    %79 = vmatprep.subr.mxu0 0.0
    %80 = vmatpush2.msra.mxu0 0.0
    %81 = vmatprep.subr.mxu0 0.0
    %82 = vmatpush2.msra.mxu0 0.0
    %83 = vmatprep.subr.mxu0 0.0
    %84 = vmatpush2.msra.mxu0 0.0
    %85 = vmatprep.subr.mxu0 0.0
    %86 = vmatpush2.msra.mxu0 0.0
    %87 = vmatprep.subr.mxu0 0.0
    %88 = vmatpush2.msra.mxu0 0.0
    %89 = vmatprep.subr.mxu0 0.0
    %90 = vmatpush2.msra.mxu0 0.0
    %91 = vmatprep.subr.mxu0 0.0
    %92 = vmatpush2.msra.mxu0 0.0
    %93 = vmatprep.subr.mxu0 0.0
    %94 = vmatpush2.msra.mxu0 0.0
    %95 = vmatprep.subr.mxu0 0.0
    %96 = vmatpush2.msra.mxu0 0.0
    %97 = vmatprep.subr.mxu0 0.0
    %98 = vmatpush2.msra.mxu0 0.0
    %99 = vmatprep.subr.mxu0 0.0
    %100 = vmatpush2.msra.mxu0 0.0
    %101 = vmatprep.subr.mxu0 0.0
    %102 = vmatpush2.msra.mxu0 0.0
    %103 = vmatprep.subr.mxu0 0.0
    %104 = vmatpush2.msra.mxu0 0.0
    %105 = vmatprep.subr.mxu0 0.0
    %106 = vmatpush2.msra.mxu0 0.0
    %107 = vmatprep.mubr.f32.mxu0 0.0
    %108 = vmatmul.mubr.f32.gmra.mxu0 %v41
    %v109 = vpop.f32.mrf.mxu0
    %v110 = vadd.f32 %v37, %v109
    %v111 = vpop.f32.mrf.mxu0
    %112 = vdwg.mxu0
    %v113 = vmax.f32 %v110, 0.0
    %v114 = vld [vmem:[%s3] sm:$0xff]
    %v115 = vld [vmem:[%s3 + $0x8] sm:$0xff]
    %v116 = vld [vmem:[%s3 + $0x10] sm:$0xff]
    %v117 = vld [vmem:[%s3 + $0x18] sm:$0xff]
    %v118 = vld [vmem:[%s3 + $0x20] sm:$0xff]
    %v119 = vld [vmem:[%s3 + $0x28] sm:$0xff]
    %v120 = vld [vmem:[%s3 + $0x30] sm:$0xff]
    %v121 = vld [vmem:[%s3 + $0x38] sm:$0xff]
    %v122 = vld [vmem:[%s4] sm:$0x1]
    %v124 = vlaneseq
    %v125 = vshrl.u32 %v124, 7
    %v126 = vsub.s32 0, %v125
    %v127 = vrot.slane %v122, %v126
    %vm129 = vcmask 523264
    %v131 = vsel %vm129, %v113, 0
    %133 = vmatprep.subr.mxu0 0.0
    %134 = vmatpush1.msra.mxu0 0.0
    %135 = vmatprep.subr.mxu0 0.0
    %136 = vmatpush1.msra.mxu0 0.0
    %137 = vmatprep.subr.mxu0 0.0
    %138 = vmatpush1.msra.mxu0 0.0
    %139 = vmatprep.subr.mxu0 0.0
    %140 = vmatpush1.msra.mxu0 0.0
    %141 = vmatprep.subr.mxu0 0.0
    %142 = vmatpush1.msra.mxu0 0.0
    %143 = vmatprep.subr.mxu0 0.0
    %144 = vmatpush1.msra.mxu0 0.0
    %145 = vmatprep.subr.mxu0 0.0
    %146 = vmatpush1.msra.mxu0 0.0
    %147 = vmatprep.subr.mxu0 0.0
    %148 = vmatpush1.msra.mxu0 0.0
    %149 = vmatprep.subr.mxu0 0.0
    %150 = vmatpush1.msra.mxu0 %v121
    %151 = vmatprep.subr.mxu0 0.0
    %152 = vmatpush1.msra.mxu0 %v120
    %153 = vmatprep.subr.mxu0 0.0
    %154 = vmatpush1.msra.mxu0 %v119
    %155 = vmatprep.subr.mxu0 0.0
    %156 = vmatpush1.msra.mxu0 %v118
    %157 = vmatprep.subr.mxu0 0.0
    %158 = vmatpush1.msra.mxu0 %v117
    %159 = vmatprep.subr.mxu0 0.0
    %160 = vmatpush1.msra.mxu0 %v116
    %161 = vmatprep.subr.mxu0 0.0
    %162 = vmatpush1.msra.mxu0 %v115
    %163 = vmatprep.subr.mxu0 0.0
    %164 = vmatpush1.msra.mxu0 %v114
    %165 = vmatprep.subr.mxu0 0.0
    %166 = vmatpush2.msra.mxu0 0.0
    %167 = vmatprep.subr.mxu0 0.0
    %168 = vmatpush2.msra.mxu0 0.0
    %169 = vmatprep.subr.mxu0 0.0
    %170 = vmatpush2.msra.mxu0 0.0
    %171 = vmatprep.subr.mxu0 0.0
    %172 = vmatpush2.msra.mxu0 0.0
    %173 = vmatprep.subr.mxu0 0.0
    %174 = vmatpush2.msra.mxu0 0.0
    %175 = vmatprep.subr.mxu0 0.0
    %176 = vmatpush2.msra.mxu0 0.0
    %177 = vmatprep.subr.mxu0 0.0
    %178 = vmatpush2.msra.mxu0 0.0
    %179 = vmatprep.subr.mxu0 0.0
    %180 = vmatpush2.msra.mxu0 0.0
    %181 = vmatprep.subr.mxu0 0.0
    %182 = vmatpush2.msra.mxu0 0.0
    %183 = vmatprep.subr.mxu0 0.0
    %184 = vmatpush2.msra.mxu0 0.0
    %185 = vmatprep.subr.mxu0 0.0
    %186 = vmatpush2.msra.mxu0 0.0
    %187 = vmatprep.subr.mxu0 0.0
    %188 = vmatpush2.msra.mxu0 0.0
    %189 = vmatprep.subr.mxu0 0.0
    %190 = vmatpush2.msra.mxu0 0.0
    %191 = vmatprep.subr.mxu0 0.0
    %192 = vmatpush2.msra.mxu0 0.0
    %193 = vmatprep.subr.mxu0 0.0
    %194 = vmatpush2.msra.mxu0 0.0
    %195 = vmatprep.subr.mxu0 0.0
    %196 = vmatpush2.msra.mxu0 0.0
    %197 = vmatprep.mubr.f32.mxu0 0.0
    %198 = vmatmul.mubr.f32.gmra.mxu0 %v131
    %v199 = vpop.f32.mrf.mxu0
    %v200 = vadd.f32 %v127, %v199
    %v201 = vpop.f32.mrf.mxu0
    %202 = vdwg.mxu0
    %v203 = vmax.f32 %v200, 0.0
    %v204 = vld [vmem:[%s5] sm:$0xff]
    %v205 = vld [vmem:[%s5 + $0x8] sm:$0xff]
    %v206 = vld [vmem:[%s5 + $0x10] sm:$0xff]
    %v207 = vld [vmem:[%s5 + $0x18] sm:$0xff]
    %v208 = vld [vmem:[%s6] sm:$0x1]
    %v210 = vlaneseq
    %v211 = vshrl.u32 %v210, 7
    %v212 = vsub.s32 0, %v211
    %v213 = vrot.slane %v208, %v212
    %v216 = vsel %vm39, %v203, 0
    %218 = vmatprep.subr.mxu0 0.0
    %219 = vmatpush1.msra.mxu0 0.0
    %220 = vmatprep.subr.mxu0 0.0
    %221 = vmatpush1.msra.mxu0 0.0
    %222 = vmatprep.subr.mxu0 0.0
    %223 = vmatpush1.msra.mxu0 0.0
    %224 = vmatprep.subr.mxu0 0.0
    %225 = vmatpush1.msra.mxu0 0.0
    %226 = vmatprep.subr.mxu0 0.0
    %227 = vmatpush1.msra.mxu0 0.0
    %228 = vmatprep.subr.mxu0 0.0
    %229 = vmatpush1.msra.mxu0 0.0
    %230 = vmatprep.subr.mxu0 0.0
    %231 = vmatpush1.msra.mxu0 0.0
    %232 = vmatprep.subr.mxu0 0.0
    %233 = vmatpush1.msra.mxu0 0.0
    %234 = vmatprep.subr.mxu0 0.0
    %235 = vmatpush1.msra.mxu0 0.0
    %236 = vmatprep.subr.mxu0 0.0
    %237 = vmatpush1.msra.mxu0 0.0
    %238 = vmatprep.subr.mxu0 0.0
    %239 = vmatpush1.msra.mxu0 0.0
    %240 = vmatprep.subr.mxu0 0.0
    %241 = vmatpush1.msra.mxu0 0.0
    %242 = vmatprep.subr.mxu0 0.0
    %243 = vmatpush1.msra.mxu0 %v207
    %244 = vmatprep.subr.mxu0 0.0
    %245 = vmatpush1.msra.mxu0 %v206
    %246 = vmatprep.subr.mxu0 0.0
    %247 = vmatpush1.msra.mxu0 %v205
    %248 = vmatprep.subr.mxu0 0.0
    %249 = vmatpush1.msra.mxu0 %v204
    %250 = vmatprep.subr.mxu0 0.0
    %251 = vmatpush2.msra.mxu0 0.0
    %252 = vmatprep.subr.mxu0 0.0
    %253 = vmatpush2.msra.mxu0 0.0
    %254 = vmatprep.subr.mxu0 0.0
    %255 = vmatpush2.msra.mxu0 0.0
    %256 = vmatprep.subr.mxu0 0.0
    %257 = vmatpush2.msra.mxu0 0.0
    %258 = vmatprep.subr.mxu0 0.0
    %259 = vmatpush2.msra.mxu0 0.0
    %260 = vmatprep.subr.mxu0 0.0
    %261 = vmatpush2.msra.mxu0 0.0
    %262 = vmatprep.subr.mxu0 0.0
    %263 = vmatpush2.msra.mxu0 0.0
    %264 = vmatprep.subr.mxu0 0.0
    %265 = vmatpush2.msra.mxu0 0.0
    %266 = vmatprep.subr.mxu0 0.0
    %267 = vmatpush2.msra.mxu0 0.0
    %268 = vmatprep.subr.mxu0 0.0
    %269 = vmatpush2.msra.mxu0 0.0
    %270 = vmatprep.subr.mxu0 0.0
    %271 = vmatpush2.msra.mxu0 0.0
    %272 = vmatprep.subr.mxu0 0.0
    %273 = vmatpush2.msra.mxu0 0.0
    %274 = vmatprep.subr.mxu0 0.0
    %275 = vmatpush2.msra.mxu0 0.0
    %276 = vmatprep.subr.mxu0 0.0
    %277 = vmatpush2.msra.mxu0 0.0
    %278 = vmatprep.subr.mxu0 0.0
    %279 = vmatpush2.msra.mxu0 0.0
    %280 = vmatprep.subr.mxu0 0.0
    %281 = vmatpush2.msra.mxu0 0.0
    %282 = vmatprep.mubr.f32.mxu0 0.0
    %283 = vmatmul.mubr.f32.gmra.mxu0 %v216
    %v284 = vpop.f32.mrf.mxu0
    %v285 = vadd.f32 %v213, %v284
    %v286 = vpop.f32.mrf.mxu0
    %287 = vdwg.mxu0
    %vm288 = vcmask 130048
    %v289 = vsel %vm288, %v285, -inf
    %290 = vmax.xlane.f32.xlu0 %v289
    %v291 = vpop.xlane.xlu0 %290
    %v292 = vsub.f32 %v285, %v291
    %v293 = vmul.f32 %v292, 1.442695
    %v294 = vpow.pop %v293
    %v295 = vsel %vm288, %v294, 0.0
    %296 = vadd.xlane.f32.xlu0 %v295
    %v297 = vpop.xlane.xlu0 %296
    %v298 = vrcp.pop %v297
    %v299 = vmul.f32 %v297, %v298
    %v300 = vsub.f32 2.0, %v299
    %v301 = vmul.f32 %v298, %v300
    %v302 = vmul.f32 %v294, %v301
    %303 = vst.msk [vmem:[#allocation2] sm:$0xff] %vm288, %v302
    // Predicated region
    $region30: #{tpu_custom_call.1} parent=1 // pred_check
      _
    $region31: #{tpu_custom_call.1} parent=1 // pred_check_branch
      %305 = sbr.rel (0) target = $region33
    $region32: #{tpu_custom_call.1} parent=1 // pred_region
      %s307 = ssub.s32 128, 128
      %308 = vsyncadd [#allocation3], %s307
      %s310 = sshll.u32 [#allocation2], 4
      %s311 = int_to_ptr.vmem [resolvable:$true] %s310
      %313 = dma.vmem_to_hbm [thread:$0]  %s311, 128, %s7, [#allocation3]
    $region33: #{tpu_custom_call.1} parent=1 // pred_fallthru
      _
    // Predicated region
    $region34: #{tpu_custom_call.1} parent=1 // pred_check
      _
    $region35: #{tpu_custom_call.1} parent=1 // pred_check_branch
      %315 = sbr.rel (0) target = $region37
    $region36: #{tpu_custom_call.1} parent=1 // pred_region
      %316 = dma.done [#allocation3], 128
    $region37: #{tpu_custom_call.1} parent=1 // pred_fallthru
      _
    %317 = vsyncpa [#allocation3], 1

</llo_original>
